<compile_context>
chip_gen: v7x
topology: tpu7x:2x2x1
jax: 0.10.0
libtpu: 0.0.40
codegen_flags: <defaults>
</compile_context>

<pallas_src>
import functools

import jax
import jax.numpy as jnp
from jax import lax
from jax.experimental import pallas as pl
from jax.experimental.pallas import tpu as pltpu

# MXU input dtype for both matmul stages (accumulation is always f32).  Set to
# jnp.float32 for bit-closer agreement with the f32 PyTorch reference (costs
# ~3x MXU throughput and 2x activation DMA).
_MXU_DTYPE = jnp.bfloat16


def _round_up(n, m):
    return ((n + m - 1) // m) * m


# ----------------------------------------------------------------------------
# Pallas kernel: one grid step handles `block_b` batch elements, fully batched.
# ----------------------------------------------------------------------------
def _prediction_kernel(
    hl_ref, hp_ref, lpos_ref, pposT_ref,
    w1l_ref, w1p_ref, b1_ref, whT_ref, bh_ref,
    heads_ref, dist_ref,
    *, n_mix,
):
    bt, n_l, d = hl_ref.shape
    n_p = hp_ref.shape[1]
    k3p = whT_ref.shape[0]          # 3*n_mix rounded up to a sublane multiple
    k = n_mix
    nlp = n_l * n_p
    m_tot = bt * nlp

    # ---- First Linear of the MLP (BatchNorm pre-folded into W/b) -----------
    #   concat([h_l, h_p]) @ W1^T == h_l @ W1_l + h_p @ W1_p
    # One MXU pass per node type for ALL bt batch elements (leading-dim merge
    # only, no relayout).
    xl2 = jnp.dot(hl_ref[...].reshape(bt * n_l, d), w1l_ref[...],
                  preferred_element_type=jnp.float32)            # (bt*N_l, D) f32
    xp2 = jnp.dot(hp_ref[...].reshape(bt * n_p, d), w1p_ref[...],
                  preferred_element_type=jnp.float32)            # (bt*N_p, D) f32

    # ---- Pairwise sum + ELU (Dropout p=0.1 is inference-mode identity) -----
    # NOTE: with D on lanes this stage runs at D/128 lane occupancy (fine for
    # production D >= 128; known inefficiency for D = 32, see header TODO).
    s = (xl2.reshape(bt, n_l, 1, d) + xp2.reshape(bt, 1, n_p, d)
         + b1_ref[...].reshape(1, 1, 1, d))                      # (bt,N_l,N_p,D) f32
    h = jnp.where(s > 0, s, jnp.exp(jnp.minimum(s, 0.0)) - 1.0)  # ELU (single exp)
    hf = h.reshape(m_tot, d).astype(whT_ref.dtype)               # bf16 MXU input

    # ---- Fused z_mu | z_sigma | z_pi head matmul, emitted TRANSPOSED -------
    # raw[j, m] = sum_d wh[j, d] * hf[m, d]  -> head index on sublanes, pair
    # index on lanes: all following VPU/EUP ops and the stores are lane-dense.
    raw = lax.dot_general(whT_ref[...], hf, (((1,), (1,)), ((), ())),
                          preferred_element_type=jnp.float32)    # (K3p, M)
    raw = raw + bh_ref[...]                                      # (K3p, 1) bcast

    # Tiny per-row constants: pi-row mask and the +1.0 / +1.1 ELU offsets.
    row = lax.broadcasted_iota(jnp.int32, (k3p, 1), 0)
    is_pi = (row >= 2 * k) & (row < 3 * k)
    off = jnp.where(row < k, 1.0,
                    jnp.where(row < 2 * k, 1.1, 0.0)).astype(jnp.float32)

    # One fused exp serves BOTH the softmax numerator (pi rows, max-shifted)
    # and the ELU exp(min(x, 0)) of the mu/sigma rows.
    pi_logits = raw[2 * k:3 * k, :]                              # (K, M)
    m_pi = jnp.max(pi_logits, axis=0, keepdims=True)             # (1, M)
    shifted = jnp.where(is_pi, raw - m_pi, jnp.minimum(raw, 0.0))
    ex = jnp.exp(shifted)                                        # single EUP pass
    denom = jnp.sum(ex[2 * k:3 * k, :], axis=0, keepdims=True)   # (1, M), >= 1
    pi_vals = ex * pl.reciprocal(denom, approx=True)             # EUP vrcp
    elu_vals = jnp.where(raw > 0, raw, ex - 1.0) + off           # mu: +1, sigma: +1.1
    heads = jnp.where(is_pi, pi_vals, elu_vals)                  # (K3p, M) f32

    # Store per batch element: lane slices (128-aligned when N_l*N_p % 128 == 0)
    # into a lane-dense output block.  This static loop only slices/stores; no
    # per-b temporaries are built (the flagged unroll problem does not return).
    for b in range(bt):
        heads_ref[b] = heads[:, b * nlp:(b + 1) * nlp]

    # ---- Pairwise Euclidean distances: 3-term (x - y)^2 VPU expansion ------
    lp = lpos_ref[...]                                           # (bt, N_l, 3) f32
    pp = pposT_ref[...]                                          # (bt, 3, N_p) f32
    d2 = jnp.zeros((bt, n_l, n_p), jnp.float32)
    for c in range(3):
        diff = lp[:, :, c:c + 1] - pp[:, c:c + 1, :]             # (bt, N_l, N_p)
        d2 = d2 + diff * diff
    dist_ref[...] = jnp.sqrt(d2)                                 # >= 0 by construction


# ----------------------------------------------------------------------------
# Generation-aware VMEM budgeting.
# ----------------------------------------------------------------------------
def _tpu_vmem_capacity_bytes():
    try:
        return int(pltpu.get_tpu_info().vmem_capacity_bytes)
    except Exception:
        return 64 * 1024 * 1024          # conservative default (v7x-class part)


def _per_step_vmem_bytes(bt, n_l, n_p, d, k3p):
    """Rough per-grid-step footprint: double-buffered IO blocks + live temps."""
    r8 = lambda v: _round_up(v, 8)
    r128 = lambda v: _round_up(v, 128)
    act = 2 if _MXU_DTYPE == jnp.bfloat16 else 4
    nlp = n_l * n_p
    io_in = bt * (r8(n_l) * r128(d) * act + r8(n_p) * r128(d) * act
                  + r8(n_l) * 128 * 4 + 8 * r128(n_p) * 4)
    io_out = bt * (r8(k3p) * r128(nlp) * 4 + r8(n_l) * r128(n_p) * 4)
    weights = ((2 * r8(d) + r8(k3p)) * r128(d) * act
               + 8 * r128(d) * 4 + r8(k3p) * 128 * 4)
    temps = (bt * n_l * r8(n_p) * r128(d) * (4 + act)     # pairwise slab f32 + bf16
             + 2 * r8(k3p) * r128(bt * nlp) * 4           # raw + activated head slab
             + bt * (r8(n_l) + r8(n_p)) * r128(d) * 4)    # first-linear outputs
    return 2 * (io_in + io_out) + weights + temps


def _choose_block_b(B, n_l, n_p, d, k3p):
    """Largest divisor of B whose per-step footprint fits a generation-aware
    VMEM budget.  Only 2-TensorCore (v7x-class, 64 MiB VMEM) parts keep the
    '>= 2 grid steps so ("parallel",) can use both cores' rule."""
    cap = _tpu_vmem_capacity_bytes()
    budget = min(32 * 1024 * 1024, cap // 4)
    multi_tc = cap <= 80 * 1024 * 1024   # proxy: 64 MiB VMEM => v7x (2 TCs/chip)
    bt = 1
    for cand in range(min(B, 64), 0, -1):
        if B % cand:
            continue
        if _per_step_vmem_bytes(cand, n_l, n_p, d, k3p) > budget:
            continue
        bt = cand
        break
    if multi_tc:
        while bt > 1 and B // bt < 2:
            bt -= 1
            while bt > 1 and B % bt:
                bt -= 1
    return max(bt, 1)


# ----------------------------------------------------------------------------
# Jitted dense forward (pallas_call) + eager dynamic-shape gather wrapper.
# ----------------------------------------------------------------------------
@functools.partial(jax.jit, static_argnames=("block_b", "n_mix"))
def _dense_forward(h_l_x, h_p_x, h_l_pos, h_p_pos, params, *, block_b, n_mix):
    B, N_l, D = h_l_x.shape
    N_p = h_p_x.shape[1]
    K3p = params["whT"].shape[0]
    NLP = N_l * N_p
    Bt = block_b
    grid = (B // Bt,)

    # Protein positions pre-transposed (B, 3, N_p): the kernel's VPU distance
    # expansion then needs no in-kernel relayout and no 3 -> 128 lane padding.
    ppos_t = jnp.transpose(h_p_pos.astype(jnp.float32), (0, 2, 1))

    cap = _tpu_vmem_capacity_bytes()
    need = 2 * _per_step_vmem_bytes(Bt, N_l, N_p, D, K3p)
    vmem_limit = int(min(max(need, 32 * 1024 * 1024), (cap * 3) // 4))

    def bblock(*dims):
        return pl.BlockSpec((Bt,) + dims, lambda i: (i,) + (0,) * len(dims))

    def whole(*dims):
        return pl.BlockSpec(dims, lambda i: (0,) * len(dims))

    heads_t, dist = pl.pallas_call(
        functools.partial(_prediction_kernel, n_mix=n_mix),
        out_shape=(jax.ShapeDtypeStruct((B, K3p, NLP), jnp.float32),
                   jax.ShapeDtypeStruct((B, N_l, N_p), jnp.float32)),
        grid_spec=pltpu.PrefetchScalarGridSpec(
            num_scalar_prefetch=0,
            grid=grid,
            in_specs=[
                bblock(N_l, D), bblock(N_p, D),
                bblock(N_l, 3), bblock(3, N_p),
                whole(D, D), whole(D, D), whole(1, D),
                whole(K3p, D), whole(K3p, 1),
            ],
            out_specs=[bblock(K3p, NLP), bblock(N_l, N_p)],
        ),
        compiler_params=pltpu.CompilerParams(
            dimension_semantics=("parallel",),
            vmem_limit_bytes=vmem_limit),
    )(h_l_x.astype(params["w1l"].dtype), h_p_x.astype(params["w1p"].dtype),
      h_l_pos.astype(jnp.float32), ppos_t,
      params["w1l"], params["w1p"], params["b1"], params["whT"], params["bh"])
    return heads_t, dist


def prediction_score_forward(h_l_x, h_p_x, h_l_pos, h_p_pos, l_mask, p_mask,
                             params, *, block_b=None):
    B, N_l, D = h_l_x.shape
    N_p = h_p_x.shape[1]
    K = int(params["n_mix"])
    K3p = params["whT"].shape[0]
    NLP = N_l * N_p
    if block_b is None:
        block_b = _choose_block_b(B, N_l, N_p, D, K3p)
    assert B % block_b == 0, "block_b must divide the batch size"

    dense_params = {k: v for k, v in params.items() if k != "n_mix"}
    heads_t, dist = _dense_forward(h_l_x, h_p_x, h_l_pos, h_p_pos, dense_params,
                                   block_b=block_b, n_mix=K)

    # Boolean gather equivalent to C[C_mask]: dynamically shaped, so it stays
    # outside jit (eager).  heads_t is (B, K3p, N_l*N_p); the permute back to
    # pair-major mirrors the reference's dense-C materialisation and can be
    # fused into the downstream MDN loss in production.
    C_mask = (l_mask[:, :, None] & p_mask[:, None, :]).reshape(-1)       # (B*NLP,)
    flat = heads_t.transpose(0, 2, 1).reshape(B * NLP, K3p)[C_mask]      # (M, K3p)
    mu = flat[:, :K]
    sigma = flat[:, K:2 * K]
    pi = flat[:, 2 * K:3 * K]
    dist = dist.reshape(-1)[C_mask][:, None]                             # .unsqueeze(1)
    C_batch = jnp.broadcast_to(jnp.arange(B)[:, None],
                               (B, NLP)).reshape(-1)[C_mask]
    return pi, sigma, mu, dist, C_batch


# ----------------------------------------------------------------------------
# Parameter prep: nn.Linear / nn.BatchNorm1d layouts, BN + heads pre-folded.
# ----------------------------------------------------------------------------
def init_params(key, out_dim, n_mix=10, mxu_dtype=_MXU_DTYPE):
    D, K = out_dim, n_mix
    k3 = 3 * K
    k3p = _round_up(k3, 8)            # sublane-aligned padded head count (30 -> 32)
    ks = jax.random.split(key, 5)

    # nn.Linear(2D -> D): torch weight (D, 2D), y = x @ W^T + b, x = [h_l || h_p].
    W1 = jax.random.normal(ks[0], (D, 2 * D), jnp.float32) * 0.05
    b1 = jax.random.normal(ks[1], (D,), jnp.float32) * 0.05

    # nn.BatchNorm1d(D), eval mode with fresh-module running stats.
    # TODO(synk): training-mode BN over C[C_mask] batch statistics not implemented.
    eps = 1e-5
    gamma, beta = jnp.ones((D,), jnp.float32), jnp.zeros((D,), jnp.float32)
    mean, var = jnp.zeros((D,), jnp.float32), jnp.ones((D,), jnp.float32)
    s = gamma / jnp.sqrt(var + eps)
    shift = beta - mean * s

    # Fold BN into the first Linear (column scale of W^T, shift into the bias).
    w1l = (W1[:, :D].T * s[None, :]).astype(mxu_dtype)           # applied to h_l
    w1p = (W1[:, D:].T * s[None, :]).astype(mxu_dtype)           # applied to h_p
    b1f = (b1 * s + shift).reshape(1, -1).astype(jnp.float32)

    # Heads z_mu / z_sigma / z_pi: Linear(D -> K) each, fused, TRANSPOSED
    # (rows = head outputs) and zero-padded to k3p rows for sublane alignment.
    def head(k_):
        kw, kb = jax.random.split(k_)
        W = jax.random.normal(kw, (K, D), jnp.float32) * 0.05    # torch (K, D)
        b = jax.random.normal(kb, (K,), jnp.float32) * 0.05
        return W, b
    wmu, bmu = head(ks[2])
    wsig, bsig = head(ks[3])
    wpi, bpi = head(ks[4])
    whT = jnp.zeros((k3p, D), jnp.float32)
    whT = whT.at[:K].set(wmu).at[K:2 * K].set(wsig).at[2 * K:3 * K].set(wpi)
    bh = jnp.zeros((k3p, 1), jnp.float32)
    bh = bh.at[:K, 0].set(bmu).at[K:2 * K, 0].set(bsig).at[2 * K:3 * K, 0].set(bpi)

    return {"w1l": w1l, "w1p": w1p, "b1": b1f,
            "whT": whT.astype(mxu_dtype), "bh": bh, "n_mix": K}


if __name__ == "__main__":
    B, N_l, N_p, D = 2, 8, 16, 32   # out_dim = 32, max ligand/protein nodes per graph

    key = jax.random.PRNGKey(0)
    k = jax.random.split(key, 6)

    # Synthetic stand-ins for the graph-encoder outputs and node positions,
    # dense-batched with fill_value=0 (as to_dense_batch_dgl would produce).
    l_counts = jnp.array([8, 5], jnp.int32)
    p_counts = jnp.array([16, 11], jnp.int32)
    l_mask = jnp.arange(N_l)[None, :] < l_counts[:, None]        # (B, N_l) bool
    p_mask = jnp.arange(N_p)[None, :] < p_counts[:, None]        # (B, N_p) bool

    h_l_x = jax.random.normal(k[0], (B, N_l, D), jnp.float32) * l_mask[..., None]
    h_p_x = jax.random.normal(k[1], (B, N_p, D), jnp.float32) * p_mask[..., None]
    h_l_pos = jax.random.normal(k[2], (B, N_l, 3), jnp.float32) * l_mask[..., None]
    h_p_pos = jax.random.normal(k[3], (B, N_p, 3), jnp.float32) * p_mask[..., None]

    params = init_params(k[4], D)

    pi, sigma, mu, dist, C_batch = prediction_score_forward(
        h_l_x, h_p_x, h_l_pos, h_p_pos, l_mask, p_mask, params)
    jax.block_until_ready((pi, sigma, mu, dist, C_batch))

    n_valid = int(jnp.sum(l_counts * p_counts))
    assert pi.shape == (n_valid, 10) and sigma.shape == (n_valid, 10)
    assert mu.shape == (n_valid, 10) and dist.shape == (n_valid, 1)
    assert C_batch.shape == (n_valid,)
    assert bool(jnp.all(jnp.isfinite(pi))) and bool(jnp.all(jnp.isfinite(dist)))
    assert bool(jnp.all(jnp.abs(jnp.sum(pi, axis=-1) - 1.0) < 1e-2))
    assert bool(jnp.all(sigma > 0.05)) and bool(jnp.all(mu > -0.05))
    print("KERNEL_OK")
</pallas_src>

<mosaic_0001>
module attributes {stable_mosaic.version = 11 : i64} {
  func.func @_prediction_kernel(%arg0: i32, %arg1: memref<1x8x32xbf16, #tpu.memory_space<vmem>>, %arg2: memref<1x16x32xbf16, #tpu.memory_space<vmem>>, %arg3: memref<1x8x3xf32, #tpu.memory_space<vmem>>, %arg4: memref<1x3x16xf32, #tpu.memory_space<vmem>>, %arg5: memref<32x32xbf16, #tpu.memory_space<vmem>>, %arg6: memref<32x32xbf16, #tpu.memory_space<vmem>>, %arg7: memref<1x32xf32, #tpu.memory_space<vmem>>, %arg8: memref<32x32xbf16, #tpu.memory_space<vmem>>, %arg9: memref<32x1xf32, #tpu.memory_space<vmem>>, %arg10: memref<1x32x128xf32, #tpu.memory_space<vmem>>, %arg11: memref<1x8x16xf32, #tpu.memory_space<vmem>>) attributes {dimension_semantics = [#tpu.dimension_semantics<parallel>], iteration_bounds = array<i64: 2>, scalar_prefetch = 0 : i64, scratch_operands = 0 : i64, tpu.core_type = #tpu.core_type<tc>, window_params = [{transform_indices = @transform_0, window_bounds = array<i64: 1, 8, 32>}, {transform_indices = @transform_1, window_bounds = array<i64: 1, 16, 32>}, {transform_indices = @transform_2, window_bounds = array<i64: 1, 8, 3>}, {transform_indices = @transform_3, window_bounds = array<i64: 1, 3, 16>}, {pipeline_mode = #tpu.pipeline_mode<synchronous>, transform_indices = @transform_4, window_bounds = array<i64: 32, 32>}, {pipeline_mode = #tpu.pipeline_mode<synchronous>, transform_indices = @transform_5, window_bounds = array<i64: 32, 32>}, {pipeline_mode = #tpu.pipeline_mode<synchronous>, transform_indices = @transform_6, window_bounds = array<i64: 1, 32>}, {pipeline_mode = #tpu.pipeline_mode<synchronous>, transform_indices = @transform_7, window_bounds = array<i64: 32, 32>}, {pipeline_mode = #tpu.pipeline_mode<synchronous>, transform_indices = @transform_8, window_bounds = array<i64: 32, 1>}, {transform_indices = @transform_9, window_bounds = array<i64: 1, 32, 128>}, {transform_indices = @transform_10, window_bounds = array<i64: 1, 8, 16>}]} {
    %c0 = arith.constant 0 : index
    %c0_0 = arith.constant 0 : index
    %c0_1 = arith.constant 0 : index
    %0 = vector.load %arg1[%c0, %c0_0, %c0_1] : memref<1x8x32xbf16, #tpu.memory_space<vmem>>, vector<1x8x32xbf16>
    %1 = vector.shape_cast %0 : vector<1x8x32xbf16> to vector<8x32xbf16>
    %c0_2 = arith.constant 0 : index
    %c0_3 = arith.constant 0 : index
    %2 = vector.load %arg5[%c0_2, %c0_3] : memref<32x32xbf16, #tpu.memory_space<vmem>>, vector<32x32xbf16>
    %cst = arith.constant dense<0.000000e+00> : vector<8x32xf32>
    %3 = tpu.matmul %1, %2, %cst {dimension_numbers = #tpu.dot_dimension_numbers<[1], [0], [0], [1], [0, 0, 1, 1], [], []>} : vector<8x32xbf16>, vector<32x32xbf16>, vector<8x32xf32> -> vector<8x32xf32>
    %c0_4 = arith.constant 0 : index
    %c0_5 = arith.constant 0 : index
    %c0_6 = arith.constant 0 : index
    %4 = vector.load %arg2[%c0_4, %c0_5, %c0_6] : memref<1x16x32xbf16, #tpu.memory_space<vmem>>, vector<1x16x32xbf16>
    %5 = vector.shape_cast %4 : vector<1x16x32xbf16> to vector<16x32xbf16>
    %c0_7 = arith.constant 0 : index
    %c0_8 = arith.constant 0 : index
    %6 = vector.load %arg6[%c0_7, %c0_8] : memref<32x32xbf16, #tpu.memory_space<vmem>>, vector<32x32xbf16>
    %cst_9 = arith.constant dense<0.000000e+00> : vector<16x32xf32>
    %7 = tpu.matmul %5, %6, %cst_9 {dimension_numbers = #tpu.dot_dimension_numbers<[1], [0], [0], [1], [0, 0, 1, 1], [], []>} : vector<16x32xbf16>, vector<32x32xbf16>, vector<16x32xf32> -> vector<16x32xf32>
    %8 = vector.shape_cast %3 : vector<8x32xf32> to vector<1x8x1x32xf32>
    %9 = vector.shape_cast %7 : vector<16x32xf32> to vector<1x1x16x32xf32>
    %10 = vector.broadcast %8 : vector<1x8x1x32xf32> to vector<1x8x16x32xf32>
    %11 = vector.broadcast %9 : vector<1x1x16x32xf32> to vector<1x8x16x32xf32>
    %12 = arith.addf %10, %11 : vector<1x8x16x32xf32>
    %c0_10 = arith.constant 0 : index
    %c0_11 = arith.constant 0 : index
    %13 = vector.load %arg7[%c0_10, %c0_11] : memref<1x32xf32, #tpu.memory_space<vmem>>, vector<1x32xf32>
    %14 = vector.shape_cast %13 : vector<1x32xf32> to vector<1x1x1x32xf32>
    %15 = vector.broadcast %14 : vector<1x1x1x32xf32> to vector<1x8x16x32xf32>
    %16 = arith.addf %12, %15 : vector<1x8x16x32xf32>
    %cst_12 = arith.constant 0.000000e+00 : f32
    %17 = vector.broadcast %cst_12 : f32 to vector<1x8x16x32xf32>
    %18 = arith.cmpf ogt, %16, %17 : vector<1x8x16x32xf32>
    %cst_13 = arith.constant 0.000000e+00 : f32
    %19 = vector.broadcast %cst_13 : f32 to vector<1x8x16x32xf32>
    %20 = arith.minimumf %16, %19 : vector<1x8x16x32xf32>
    %21 = math.exp %20 : vector<1x8x16x32xf32>
    %cst_14 = arith.constant 1.000000e+00 : f32
    %22 = vector.broadcast %cst_14 : f32 to vector<1x8x16x32xf32>
    %23 = arith.subf %21, %22 : vector<1x8x16x32xf32>
    %24 = arith.select %18, %16, %23 : vector<1x8x16x32xi1>, vector<1x8x16x32xf32>
    %25 = vector.shape_cast %24 : vector<1x8x16x32xf32> to vector<128x32xf32>
    %26 = arith.truncf %25 : vector<128x32xf32> to vector<128x32xbf16>
    %c0_15 = arith.constant 0 : index
    %c0_16 = arith.constant 0 : index
    %27 = vector.load %arg8[%c0_15, %c0_16] : memref<32x32xbf16, #tpu.memory_space<vmem>>, vector<32x32xbf16>
    %cst_17 = arith.constant dense<0.000000e+00> : vector<32x128xf32>
    %28 = tpu.matmul %27, %26, %cst_17 {dimension_numbers = #tpu.dot_dimension_numbers<[1], [1], [0], [0], [0, 0, 1, 0], [], []>} : vector<32x32xbf16>, vector<128x32xbf16>, vector<32x128xf32> -> vector<32x128xf32>
    %c0_18 = arith.constant 0 : index
    %c0_19 = arith.constant 0 : index
    %29 = vector.load %arg9[%c0_18, %c0_19] : memref<32x1xf32, #tpu.memory_space<vmem>>, vector<32x1xf32>
    %30 = vector.broadcast %29 : vector<32x1xf32> to vector<32x128xf32>
    %31 = arith.addf %28, %30 : vector<32x128xf32>
    %32 = tpu.iota {dimensions = array<i32: 0>} : vector<32x1xi32>
    %c20_i32 = arith.constant 20 : i32
    %33 = vector.broadcast %c20_i32 : i32 to vector<32x1xi32>
    %34 = arith.cmpi sge, %32, %33 : vector<32x1xi32>
    %c30_i32 = arith.constant 30 : i32
    %35 = vector.broadcast %c30_i32 : i32 to vector<32x1xi32>
    %36 = arith.cmpi slt, %32, %35 : vector<32x1xi32>
    %37 = arith.andi %34, %36 : vector<32x1xi1>
    %c10_i32 = arith.constant 10 : i32
    %38 = vector.broadcast %c10_i32 : i32 to vector<32x1xi32>
    %39 = arith.cmpi slt, %32, %38 : vector<32x1xi32>
    %c20_i32_20 = arith.constant 20 : i32
    %40 = vector.broadcast %c20_i32_20 : i32 to vector<32x1xi32>
    %41 = arith.cmpi slt, %32, %40 : vector<32x1xi32>
    %cst_21 = arith.constant 1.100000e+00 : f32
    %cst_22 = arith.constant 0.000000e+00 : f32
    %42 = vector.broadcast %cst_21 : f32 to vector<32x1xf32>
    %43 = vector.broadcast %cst_22 : f32 to vector<32x1xf32>
    %44 = arith.select %41, %42, %43 : vector<32x1xi1>, vector<32x1xf32>
    %cst_23 = arith.constant 1.000000e+00 : f32
    %45 = vector.broadcast %cst_23 : f32 to vector<32x1xf32>
    %46 = arith.select %39, %45, %44 : vector<32x1xi1>, vector<32x1xf32>
    %47 = vector.extract_strided_slice %31 {offsets = [20, 0], sizes = [10, 128], strides = [1, 1]} : vector<32x128xf32> to vector<10x128xf32>
    %cst_24 = arith.constant dense<0xFF800000> : vector<128xf32>
    %48 = vector.multi_reduction <maximumf>, %47, %cst_24 [0] : vector<10x128xf32> to vector<128xf32>
    %49 = vector.shape_cast %48 : vector<128xf32> to vector<1x128xf32>
    %50 = vector.broadcast %49 : vector<1x128xf32> to vector<32x128xf32>
    %51 = arith.subf %31, %50 : vector<32x128xf32>
    %cst_25 = arith.constant 0.000000e+00 : f32
    %52 = vector.broadcast %cst_25 : f32 to vector<32x128xf32>
    %53 = arith.minimumf %31, %52 : vector<32x128xf32>
    %54 = vector.shape_cast %37 : vector<32x1xi1> to vector<32x1xi1>
    %55 = vector.broadcast %54 : vector<32x1xi1> to vector<32x128xi1>
    %56 = arith.select %55, %51, %53 : vector<32x128xi1>, vector<32x128xf32>
    %57 = math.exp %56 : vector<32x128xf32>
    %58 = vector.extract_strided_slice %57 {offsets = [20, 0], sizes = [10, 128], strides = [1, 1]} : vector<32x128xf32> to vector<10x128xf32>
    %cst_26 = arith.constant dense<0.000000e+00> : vector<128xf32>
    %59 = vector.multi_reduction <add>, %58, %cst_26 [0] : vector<10x128xf32> to vector<128xf32>
    %60 = vector.shape_cast %59 : vector<128xf32> to vector<1x128xf32>
    %61 = tpu.reciprocal %60 {approx = true} : vector<1x128xf32> -> vector<1x128xf32>
    %62 = vector.broadcast %61 : vector<1x128xf32> to vector<32x128xf32>
    %63 = arith.mulf %57, %62 : vector<32x128xf32>
    %cst_27 = arith.constant 0.000000e+00 : f32
    %64 = vector.broadcast %cst_27 : f32 to vector<32x128xf32>
    %65 = arith.cmpf ogt, %31, %64 : vector<32x128xf32>
    %cst_28 = arith.constant 1.000000e+00 : f32
    %66 = vector.broadcast %cst_28 : f32 to vector<32x128xf32>
    %67 = arith.subf %57, %66 : vector<32x128xf32>
    %68 = arith.select %65, %31, %67 : vector<32x128xi1>, vector<32x128xf32>
    %69 = vector.broadcast %46 : vector<32x1xf32> to vector<32x128xf32>
    %70 = arith.addf %68, %69 : vector<32x128xf32>
    %71 = vector.shape_cast %37 : vector<32x1xi1> to vector<32x1xi1>
    %72 = vector.broadcast %71 : vector<32x1xi1> to vector<32x128xi1>
    %73 = arith.select %72, %63, %70 : vector<32x128xi1>, vector<32x128xf32>
    %c0_29 = arith.constant 0 : index
    %c0_30 = arith.constant 0 : index
    %c0_31 = arith.constant 0 : index
    %74 = vector.load %arg10[%c0_29, %c0_30, %c0_31] : memref<1x32x128xf32, #tpu.memory_space<vmem>>, vector<1x32x128xf32>
    %75 = vector.shape_cast %74 : vector<1x32x128xf32> to vector<32x128xf32>
    %76 = vector.shape_cast %73 : vector<32x128xf32> to vector<1x32x128xf32>
    tpu.vector_store %arg10[%c0_29, %c0_30, %c0_31], %76 {strides = array<i32>} : memref<1x32x128xf32, #tpu.memory_space<vmem>>, vector<1x32x128xf32>,
    %c0_32 = arith.constant 0 : index
    %c0_33 = arith.constant 0 : index
    %c0_34 = arith.constant 0 : index
    %77 = vector.load %arg3[%c0_32, %c0_33, %c0_34] : memref<1x8x3xf32, #tpu.memory_space<vmem>>, vector<1x8x3xf32>
    %c0_35 = arith.constant 0 : index
    %c0_36 = arith.constant 0 : index
    %c0_37 = arith.constant 0 : index
    %78 = vector.load %arg4[%c0_35, %c0_36, %c0_37] : memref<1x3x16xf32, #tpu.memory_space<vmem>>, vector<1x3x16xf32>
    %cst_38 = arith.constant 0.000000e+00 : f32
    %79 = vector.broadcast %cst_38 : f32 to vector<1x8x16xf32>
    %80 = vector.extract_strided_slice %77 {offsets = [0, 0, 0], sizes = [1, 8, 1], strides = [1, 1, 1]} : vector<1x8x3xf32> to vector<1x8x1xf32>
    %81 = vector.extract_strided_slice %78 {offsets = [0, 0, 0], sizes = [1, 1, 16], strides = [1, 1, 1]} : vector<1x3x16xf32> to vector<1x1x16xf32>
    %82 = vector.broadcast %80 : vector<1x8x1xf32> to vector<1x8x16xf32>
    %83 = vector.broadcast %81 : vector<1x1x16xf32> to vector<1x8x16xf32>
    %84 = arith.subf %82, %83 : vector<1x8x16xf32>
    %85 = arith.mulf %84, %84 : vector<1x8x16xf32>
    %86 = arith.addf %79, %85 : vector<1x8x16xf32>
    %87 = vector.extract_strided_slice %77 {offsets = [0, 0, 1], sizes = [1, 8, 1], strides = [1, 1, 1]} : vector<1x8x3xf32> to vector<1x8x1xf32>
    %88 = vector.extract_strided_slice %78 {offsets = [0, 1, 0], sizes = [1, 1, 16], strides = [1, 1, 1]} : vector<1x3x16xf32> to vector<1x1x16xf32>
    %89 = vector.broadcast %87 : vector<1x8x1xf32> to vector<1x8x16xf32>
    %90 = vector.broadcast %88 : vector<1x1x16xf32> to vector<1x8x16xf32>
    %91 = arith.subf %89, %90 : vector<1x8x16xf32>
    %92 = arith.mulf %91, %91 : vector<1x8x16xf32>
    %93 = arith.addf %86, %92 : vector<1x8x16xf32>
    %94 = vector.extract_strided_slice %77 {offsets = [0, 0, 2], sizes = [1, 8, 1], strides = [1, 1, 1]} : vector<1x8x3xf32> to vector<1x8x1xf32>
    %95 = vector.extract_strided_slice %78 {offsets = [0, 2, 0], sizes = [1, 1, 16], strides = [1, 1, 1]} : vector<1x3x16xf32> to vector<1x1x16xf32>
    %96 = vector.broadcast %94 : vector<1x8x1xf32> to vector<1x8x16xf32>
    %97 = vector.broadcast %95 : vector<1x1x16xf32> to vector<1x8x16xf32>
    %98 = arith.subf %96, %97 : vector<1x8x16xf32>
    %99 = arith.mulf %98, %98 : vector<1x8x16xf32>
    %100 = arith.addf %93, %99 : vector<1x8x16xf32>
    %101 = math.sqrt %100 : vector<1x8x16xf32>
    %c0_39 = arith.constant 0 : index
    %c0_40 = arith.constant 0 : index
    %c0_41 = arith.constant 0 : index
    %102 = vector.load %arg11[%c0_39, %c0_40, %c0_41] : memref<1x8x16xf32, #tpu.memory_space<vmem>>, vector<1x8x16xf32>
    tpu.vector_store %arg11[%c0_39, %c0_40, %c0_41], %101 {strides = array<i32>} : memref<1x8x16xf32, #tpu.memory_space<vmem>>, vector<1x8x16xf32>,
    return
  }
  func.func @transform_0(%arg0: i32) -> (i32, i32, i32) {
    %c0_i32 = arith.constant 0 : i32
    %c0_i32_0 = arith.constant 0 : i32
    %c0_i32_1 = arith.constant 0 : i32
    return %arg0, %c0_i32, %c0_i32_0 : i32, i32, i32
  }
  func.func @transform_1(%arg0: i32) -> (i32, i32, i32) {
    %c0_i32 = arith.constant 0 : i32
    %c0_i32_0 = arith.constant 0 : i32
    %c0_i32_1 = arith.constant 0 : i32
    return %arg0, %c0_i32, %c0_i32_0 : i32, i32, i32
  }
  func.func @transform_2(%arg0: i32) -> (i32, i32, i32) {
    %c0_i32 = arith.constant 0 : i32
    %c0_i32_0 = arith.constant 0 : i32
    %c0_i32_1 = arith.constant 0 : i32
    return %arg0, %c0_i32, %c0_i32_0 : i32, i32, i32
  }
  func.func @transform_3(%arg0: i32) -> (i32, i32, i32) {
    %c0_i32 = arith.constant 0 : i32
    %c0_i32_0 = arith.constant 0 : i32
    %c0_i32_1 = arith.constant 0 : i32
    return %arg0, %c0_i32, %c0_i32_0 : i32, i32, i32
  }
  func.func @transform_4(%arg0: i32) -> (i32, i32) {
    %c0_i32 = arith.constant 0 : i32
    %c0_i32_0 = arith.constant 0 : i32
    %c0_i32_1 = arith.constant 0 : i32
    return %c0_i32, %c0_i32_0 : i32, i32
  }
  func.func @transform_5(%arg0: i32) -> (i32, i32) {
    %c0_i32 = arith.constant 0 : i32
    %c0_i32_0 = arith.constant 0 : i32
    %c0_i32_1 = arith.constant 0 : i32
    return %c0_i32, %c0_i32_0 : i32, i32
  }
  func.func @transform_6(%arg0: i32) -> (i32, i32) {
    %c0_i32 = arith.constant 0 : i32
    %c0_i32_0 = arith.constant 0 : i32
    %c0_i32_1 = arith.constant 0 : i32
    return %c0_i32, %c0_i32_0 : i32, i32
  }
  func.func @transform_7(%arg0: i32) -> (i32, i32) {
    %c0_i32 = arith.constant 0 : i32
    %c0_i32_0 = arith.constant 0 : i32
    %c0_i32_1 = arith.constant 0 : i32
    return %c0_i32, %c0_i32_0 : i32, i32
  }
  func.func @transform_8(%arg0: i32) -> (i32, i32) {
    %c0_i32 = arith.constant 0 : i32
    %c0_i32_0 = arith.constant 0 : i32
    %c0_i32_1 = arith.constant 0 : i32
    return %c0_i32, %c0_i32_0 : i32, i32
  }
  func.func @transform_9(%arg0: i32) -> (i32, i32, i32) {
    %c0_i32 = arith.constant 0 : i32
    %c0_i32_0 = arith.constant 0 : i32
    %c0_i32_1 = arith.constant 0 : i32
    return %arg0, %c0_i32, %c0_i32_0 : i32, i32, i32
  }
  func.func @transform_10(%arg0: i32) -> (i32, i32, i32) {
    %c0_i32 = arith.constant 0 : i32
    %c0_i32_0 = arith.constant 0 : i32
    %c0_i32_1 = arith.constant 0 : i32
    return %arg0, %c0_i32, %c0_i32_0 : i32, i32, i32
  }
}

</mosaic_0001>

<llo_original>
// kernel: _dense_forward.1
$region0: #{_dense_forward.1}
  #allocation0 [shape = 'u32[]', space=smem, size = 0x4, offset = 0x4, fixed_abs, tag = 'smem constant byte address 0x4 - core index']
  #allocation1 [shape = 'u32[144,128]{1,0:T(1,128)}', space=vmem, size = 0x12000, scoped, tag = 'internal scratch']
  %s0 = inlined_call_operand.vmem [shape: bf16[2,8,32], index: 0, kind: input, shape index: {}]
  %s1 = inlined_call_operand.vmem [shape: bf16[2,16,32], index: 1, kind: input, shape index: {}]
  %s2 = inlined_call_operand.vmem [shape: f32[2,8,3], index: 2, kind: input, shape index: {}]
  %s3 = inlined_call_operand.vmem [shape: f32[2,3,16], index: 3, kind: input, shape index: {}]
  %s4 = inlined_call_operand.vmem [shape: bf16[32,32], index: 4, kind: input, shape index: {}]
  %s5 = inlined_call_operand.vmem [shape: bf16[32,32], index: 5, kind: input, shape index: {}]
  %s6 = inlined_call_operand.vmem [shape: f32[1,32], index: 6, kind: input, shape index: {}]
  %s7 = inlined_call_operand.vmem [shape: bf16[32,32], index: 7, kind: input, shape index: {}]
  %s8 = inlined_call_operand.vmem [shape: f32[32,1], index: 8, kind: input, shape index: {}]
  %s9 = inlined_call_operand.hbm [shape: f32[2,32,128], index: 9, kind: output, shape index: {0}]
  %s10 = inlined_call_operand.hbm [shape: f32[2,8,16], index: 10, kind: output, shape index: {1}]
  %11 = xla_tuple %s9, %s10
  %s12 = sld [smem:[#allocation0]]
  $region77: #{_dense_forward.1} parent=0
    _
  %s14 = ssub.s32 1, %s12
  %s15 = scalar_select 0, %s14, %s12
  $region1: #{_dense_forward.1} parent=0
    #allocation2 [shape = 'u8[32768]{0}', space=vmem, size = 0x8000, scoped, tag = 'output window, operand 0']
    #allocation3 [shape = 's32[2]{0}', space=sflag, size = 0x8, scoped, tag = 'scoped memory for _dense_forward.1']
    #allocation4 [shape = 'u8[8192]{0}', space=vmem, size = 0x2000, scoped, tag = 'output window, operand 1']
    #allocation5 [shape = 's32[2]{0}', space=sflag, size = 0x8, scoped, tag = 'scoped memory for _dense_forward.1']
    %16 = vsyncpa [#allocation3], 0
    %s17 = scalar_lea.sflag [#allocation3], 1
    %18 = vsyncpa %s17, 0
    %19 = vsyncpa [#allocation5], 0
    %s20 = scalar_lea.sflag [#allocation5], 1
    %21 = vsyncpa %s20, 0
    loop: start=0, step=1, limit=4
    $region2: #{_dense_forward.1} parent=1 // loop_pre_header
      _
    $region3: #{_dense_forward.1} parent=1 // loop_header
      %s23 = sphi 0, %s27
      %p24 = scmp.ge.s32.totalorder %s23, 4
      %s33 = sphi 0, %s35
      %s36 = sphi 0, %s33
      %s37 = sphi 0, %s36
      %s53 = sphi 0, %s37
      %s59 = sphi 0, %s61
      %s62 = sphi 0, %s59
      %s63 = sphi 0, %s62
      %s79 = sphi 0, %s63
      %s85 = sphi 0, %s87
      %s88 = sphi 0, %s85
      %s89 = sphi 0, %s88
      %s105 = sphi 0, %s89
      %s111 = sphi 0, %s113
      %s114 = sphi 0, %s111
      %s115 = sphi 0, %s114
      %s131 = sphi 0, %s115
      %s135 = sphi 0, %s135
      %s137 = sphi 0, %s135
      %s138 = sphi 0, %s137
      %s152 = sphi 0, %s138
      %s156 = sphi 0, %s156
      %s158 = sphi 0, %s156
      %s159 = sphi 0, %s158
      %s173 = sphi 0, %s159
      %s177 = sphi 0, %s177
      %s179 = sphi 0, %s177
      %s180 = sphi 0, %s179
      %s194 = sphi 0, %s180
      %s198 = sphi 0, %s198
      %s200 = sphi 0, %s198
      %s201 = sphi 0, %s200
      %s215 = sphi 0, %s201
      %s219 = sphi 0, %s219
      %s221 = sphi 0, %s219
      %s222 = sphi 0, %s221
      %s236 = sphi 0, %s222
      %s242 = sphi 0, %s244
      %s245 = sphi 0, %s242
      %s246 = sphi 0, %s245
      %s262 = sphi 0, %s246
      %s268 = sphi 0, %s270
      %s271 = sphi 0, %s268
      %s272 = sphi 0, %s271
      %s288 = sphi 0, %s272
    $region4: #{_dense_forward.1} parent=1 // loop_header_branch
      %26 = sbr.rel (%p24) target = $region8
    $region5: #{_dense_forward.1} parent=1 // loop_body
      %s28 = ssub.s32 %s23, 1
      %s29 = ssub.s32 %s23, 2
      %s30 = sadd.s32 %s23, 1
      %s31 = ssub.s32 %s23, %s30
      %p32 = scmp.eq.s32.totalorder %s31, 0
      %s34 = sadd.s32 %s33, 1
      %s35 = scalar_select %p32, %s33, %s34
      %p38 = pneg %p32
      %p39 = scmp.eq.s32.totalorder %s23, 1
      %p40 = por %p38, %p39
      %p41 = scmp.ne.s32.totalorder %s33, %s36
      %p42 = scmp.eq.s32.totalorder %s23, 0
      %p43 = por %p41, %p42
      %p44 = scmp.ne.s32.totalorder %s33, %s36
      %p45 = scmp.eq.s32.totalorder %s28, 1
      %p46 = por %p44, %p45
      %p47 = scmp.ne.s32.totalorder %s36, %s37
      %p48 = scmp.eq.s32.totalorder %s28, 0
      %p49 = por %p47, %p48
      %p50 = scmp.ne.s32.totalorder %s36, %s37
      %p51 = scmp.eq.s32.totalorder %s29, 1
      %p52 = por %p50, %p51
      %p54 = scmp.ne.s32.totalorder %s37, %s53
      %p55 = scmp.eq.s32.totalorder %s29, 0
      %p56 = por %p54, %p55
      %s57 = ssub.s32 %s23, %s30
      %p58 = scmp.eq.s32.totalorder %s57, 0
      %s60 = sadd.s32 %s59, 1
      %s61 = scalar_select %p58, %s59, %s60
      %p64 = pneg %p58
      %p65 = scmp.eq.s32.totalorder %s23, 1
      %p66 = por %p64, %p65
      %p67 = scmp.ne.s32.totalorder %s59, %s62
      %p68 = scmp.eq.s32.totalorder %s23, 0
      %p69 = por %p67, %p68
      %p70 = scmp.ne.s32.totalorder %s59, %s62
      %p71 = scmp.eq.s32.totalorder %s28, 1
      %p72 = por %p70, %p71
      %p73 = scmp.ne.s32.totalorder %s62, %s63
      %p74 = scmp.eq.s32.totalorder %s28, 0
      %p75 = por %p73, %p74
      %p76 = scmp.ne.s32.totalorder %s62, %s63
      %p77 = scmp.eq.s32.totalorder %s29, 1
      %p78 = por %p76, %p77
      %p80 = scmp.ne.s32.totalorder %s63, %s79
      %p81 = scmp.eq.s32.totalorder %s29, 0
      %p82 = por %p80, %p81
      %s83 = ssub.s32 %s23, %s30
      %p84 = scmp.eq.s32.totalorder %s83, 0
      %s86 = sadd.s32 %s85, 1
      %s87 = scalar_select %p84, %s85, %s86
      %p90 = pneg %p84
      %p91 = scmp.eq.s32.totalorder %s23, 1
      %p92 = por %p90, %p91
      %p93 = scmp.ne.s32.totalorder %s85, %s88
      %p94 = scmp.eq.s32.totalorder %s23, 0
      %p95 = por %p93, %p94
      %p96 = scmp.ne.s32.totalorder %s85, %s88
      %p97 = scmp.eq.s32.totalorder %s28, 1
      %p98 = por %p96, %p97
      %p99 = scmp.ne.s32.totalorder %s88, %s89
      %p100 = scmp.eq.s32.totalorder %s28, 0
      %p101 = por %p99, %p100
      %p102 = scmp.ne.s32.totalorder %s88, %s89
      %p103 = scmp.eq.s32.totalorder %s29, 1
      %p104 = por %p102, %p103
      %p106 = scmp.ne.s32.totalorder %s89, %s105
      %p107 = scmp.eq.s32.totalorder %s29, 0
      %p108 = por %p106, %p107
      %s109 = ssub.s32 %s23, %s30
      %p110 = scmp.eq.s32.totalorder %s109, 0
      %s112 = sadd.s32 %s111, 1
      %s113 = scalar_select %p110, %s111, %s112
      %p116 = pneg %p110
      %p117 = scmp.eq.s32.totalorder %s23, 1
      %p118 = por %p116, %p117
      %p119 = scmp.ne.s32.totalorder %s111, %s114
      %p120 = scmp.eq.s32.totalorder %s23, 0
      %p121 = por %p119, %p120
      %p122 = scmp.ne.s32.totalorder %s111, %s114
      %p123 = scmp.eq.s32.totalorder %s28, 1
      %p124 = por %p122, %p123
      %p125 = scmp.ne.s32.totalorder %s114, %s115
      %p126 = scmp.eq.s32.totalorder %s28, 0
      %p127 = por %p125, %p126
      %p128 = scmp.ne.s32.totalorder %s114, %s115
      %p129 = scmp.eq.s32.totalorder %s29, 1
      %p130 = por %p128, %p129
      %p132 = scmp.ne.s32.totalorder %s115, %s131
      %p133 = scmp.eq.s32.totalorder %s29, 0
      %p134 = por %p132, %p133
      %s136 = sadd.s32 %s135, 1
      %p139 = scmp.eq.s32.totalorder %s23, 1
      %p140 = scmp.ne.s32.totalorder %s135, %s137
      %p141 = scmp.eq.s32.totalorder %s23, 0
      %p142 = por %p140, %p141
      %p143 = scmp.ne.s32.totalorder %s135, %s137
      %p144 = scmp.eq.s32.totalorder %s28, 1
      %p145 = por %p143, %p144
      %p146 = scmp.ne.s32.totalorder %s137, %s138
      %p147 = scmp.eq.s32.totalorder %s28, 0
      %p148 = por %p146, %p147
      %p149 = scmp.ne.s32.totalorder %s137, %s138
      %p150 = scmp.eq.s32.totalorder %s29, 1
      %p151 = por %p149, %p150
      %p153 = scmp.ne.s32.totalorder %s138, %s152
      %p154 = scmp.eq.s32.totalorder %s29, 0
      %p155 = por %p153, %p154
      %s157 = sadd.s32 %s156, 1
      %p160 = scmp.eq.s32.totalorder %s23, 1
      %p161 = scmp.ne.s32.totalorder %s156, %s158
      %p162 = scmp.eq.s32.totalorder %s23, 0
      %p163 = por %p161, %p162
      %p164 = scmp.ne.s32.totalorder %s156, %s158
      %p165 = scmp.eq.s32.totalorder %s28, 1
      %p166 = por %p164, %p165
      %p167 = scmp.ne.s32.totalorder %s158, %s159
      %p168 = scmp.eq.s32.totalorder %s28, 0
      %p169 = por %p167, %p168
      %p170 = scmp.ne.s32.totalorder %s158, %s159
      %p171 = scmp.eq.s32.totalorder %s29, 1
      %p172 = por %p170, %p171
      %p174 = scmp.ne.s32.totalorder %s159, %s173
      %p175 = scmp.eq.s32.totalorder %s29, 0
      %p176 = por %p174, %p175
      %s178 = sadd.s32 %s177, 1
      %p181 = scmp.eq.s32.totalorder %s23, 1
      %p182 = scmp.ne.s32.totalorder %s177, %s179
      %p183 = scmp.eq.s32.totalorder %s23, 0
      %p184 = por %p182, %p183
      %p185 = scmp.ne.s32.totalorder %s177, %s179
      %p186 = scmp.eq.s32.totalorder %s28, 1
      %p187 = por %p185, %p186
      %p188 = scmp.ne.s32.totalorder %s179, %s180
      %p189 = scmp.eq.s32.totalorder %s28, 0
      %p190 = por %p188, %p189
      %p191 = scmp.ne.s32.totalorder %s179, %s180
      %p192 = scmp.eq.s32.totalorder %s29, 1
      %p193 = por %p191, %p192
      %p195 = scmp.ne.s32.totalorder %s180, %s194
      %p196 = scmp.eq.s32.totalorder %s29, 0
      %p197 = por %p195, %p196
      %s199 = sadd.s32 %s198, 1
      %p202 = scmp.eq.s32.totalorder %s23, 1
      %p203 = scmp.ne.s32.totalorder %s198, %s200
      %p204 = scmp.eq.s32.totalorder %s23, 0
      %p205 = por %p203, %p204
      %p206 = scmp.ne.s32.totalorder %s198, %s200
      %p207 = scmp.eq.s32.totalorder %s28, 1
      %p208 = por %p206, %p207
      %p209 = scmp.ne.s32.totalorder %s200, %s201
      %p210 = scmp.eq.s32.totalorder %s28, 0
      %p211 = por %p209, %p210
      %p212 = scmp.ne.s32.totalorder %s200, %s201
      %p213 = scmp.eq.s32.totalorder %s29, 1
      %p214 = por %p212, %p213
      %p216 = scmp.ne.s32.totalorder %s201, %s215
      %p217 = scmp.eq.s32.totalorder %s29, 0
      %p218 = por %p216, %p217
      %s220 = sadd.s32 %s219, 1
      %p223 = scmp.eq.s32.totalorder %s23, 1
      %p224 = scmp.ne.s32.totalorder %s219, %s221
      %p225 = scmp.eq.s32.totalorder %s23, 0
      %p226 = por %p224, %p225
      %p227 = scmp.ne.s32.totalorder %s219, %s221
      %p228 = scmp.eq.s32.totalorder %s28, 1
      %p229 = por %p227, %p228
      %p230 = scmp.ne.s32.totalorder %s221, %s222
      %p231 = scmp.eq.s32.totalorder %s28, 0
      %p232 = por %p230, %p231
      %p233 = scmp.ne.s32.totalorder %s221, %s222
      %p234 = scmp.eq.s32.totalorder %s29, 1
      %p235 = por %p233, %p234
      %p237 = scmp.ne.s32.totalorder %s222, %s236
      %p238 = scmp.eq.s32.totalorder %s29, 0
      %p239 = por %p237, %p238
      %s240 = ssub.s32 %s23, %s30
      %p241 = scmp.eq.s32.totalorder %s240, 0
      %s243 = sadd.s32 %s242, 1
      %s244 = scalar_select %p241, %s242, %s243
      %p247 = pneg %p241
      %p248 = scmp.eq.s32.totalorder %s23, 1
      %p249 = por %p247, %p248
      %p250 = scmp.ne.s32.totalorder %s242, %s245
      %p251 = scmp.eq.s32.totalorder %s23, 0
      %p252 = por %p250, %p251
      %p253 = scmp.ne.s32.totalorder %s242, %s245
      %p254 = scmp.eq.s32.totalorder %s28, 1
      %p255 = por %p253, %p254
      %p256 = scmp.ne.s32.totalorder %s245, %s246
      %p257 = scmp.eq.s32.totalorder %s28, 0
      %p258 = por %p256, %p257
      %p259 = scmp.ne.s32.totalorder %s245, %s246
      %p260 = scmp.eq.s32.totalorder %s29, 1
      %p261 = por %p259, %p260
      %p263 = scmp.ne.s32.totalorder %s246, %s262
      %p264 = scmp.eq.s32.totalorder %s29, 0
      %p265 = por %p263, %p264
      %s266 = ssub.s32 %s23, %s30
      %p267 = scmp.eq.s32.totalorder %s266, 0
      %s269 = sadd.s32 %s268, 1
      %s270 = scalar_select %p267, %s268, %s269
      %p273 = pneg %p267
      %p274 = scmp.eq.s32.totalorder %s23, 1
      %p275 = por %p273, %p274
      %p276 = scmp.ne.s32.totalorder %s268, %s271
      %p277 = scmp.eq.s32.totalorder %s23, 0
      %p278 = por %p276, %p277
      %p279 = scmp.ne.s32.totalorder %s268, %s271
      %p280 = scmp.eq.s32.totalorder %s28, 1
      %p281 = por %p279, %p280
      %p282 = scmp.ne.s32.totalorder %s271, %s272
      %p283 = scmp.eq.s32.totalorder %s28, 0
      %p284 = por %p282, %p283
      %p285 = scmp.ne.s32.totalorder %s271, %s272
      %p286 = scmp.eq.s32.totalorder %s29, 1
      %p287 = por %p285, %p286
      %p289 = scmp.ne.s32.totalorder %s272, %s288
      %p290 = scmp.eq.s32.totalorder %s29, 0
      %p291 = por %p289, %p290
      %p292 = scmp.le.s32.totalorder 1, %s23
      %p293 = scmp.lt.s32.totalorder %s23, 3
      %p294 = pnand %p292, %p293
      %p295 = pneg %p294
      // Predicated region
      $region9: #{_dense_forward.1} parent=5 // pred_check
        _
      $region10: #{_dense_forward.1} parent=5 // pred_check_branch
        %297 = sbr.rel (%p294) target = $region12
      $region11: #{_dense_forward.1} parent=5 // pred_region
        %s298 = ssub.s32 %s23, 1
        // Predicated region
        $region13: #{_dense_forward.1} parent=11 // pred_check
          %p299 = pneg %p148
        $region14: #{_dense_forward.1} parent=11 // pred_check_branch
          %301 = sbr.rel (%p299) target = $region16
        $region15: #{_dense_forward.1} parent=11 // pred_region
          _
        $region16: #{_dense_forward.1} parent=11 // pred_fallthru
          _
        // Predicated region
        $region17: #{_dense_forward.1} parent=11 // pred_check
          %p302 = pneg %p169
        $region18: #{_dense_forward.1} parent=11 // pred_check_branch
          %304 = sbr.rel (%p302) target = $region20
        $region19: #{_dense_forward.1} parent=11 // pred_region
          _
        $region20: #{_dense_forward.1} parent=11 // pred_fallthru
          _
        // Predicated region
        $region21: #{_dense_forward.1} parent=11 // pred_check
          %p305 = pneg %p190
        $region22: #{_dense_forward.1} parent=11 // pred_check_branch
          %307 = sbr.rel (%p305) target = $region24
        $region23: #{_dense_forward.1} parent=11 // pred_region
          _
        $region24: #{_dense_forward.1} parent=11 // pred_fallthru
          _
        // Predicated region
        $region25: #{_dense_forward.1} parent=11 // pred_check
          %p308 = pneg %p211
        $region26: #{_dense_forward.1} parent=11 // pred_check_branch
          %310 = sbr.rel (%p308) target = $region28
        $region27: #{_dense_forward.1} parent=11 // pred_region
          _
        $region28: #{_dense_forward.1} parent=11 // pred_fallthru
          _
        // Predicated region
        $region29: #{_dense_forward.1} parent=11 // pred_check
          %p311 = pneg %p232
        $region30: #{_dense_forward.1} parent=11 // pred_check_branch
          %313 = sbr.rel (%p311) target = $region32
        $region31: #{_dense_forward.1} parent=11 // pred_region
          _
        $region32: #{_dense_forward.1} parent=11 // pred_fallthru
          _
      $region12: #{_dense_forward.1} parent=5 // pred_fallthru
        _
      %p314 = scmp.lt.s32.totalorder %s23, 2
      // Predicated region
      $region33: #{_dense_forward.1} parent=5 // pred_check
        %p315 = pneg %p314
      $region34: #{_dense_forward.1} parent=5 // pred_check_branch
        %317 = sbr.rel (%p315) target = $region36
      $region35: #{_dense_forward.1} parent=5 // pred_region
        // Predicated region
        $region37: #{_dense_forward.1} parent=35 // pred_check
          %p318 = pneg %p43
        $region38: #{_dense_forward.1} parent=35 // pred_check_branch
          %320 = sbr.rel (%p318) target = $region40
        $region39: #{_dense_forward.1} parent=35 // pred_region
          %p321 = scmp.lt.s32.totalorder %s23, 1
          %s322 = scalar_select %p321, %s23, 1
          %s323 = smul.addr %s322, 4
          %s324 = scalar_lea.vmem %s0, %s323
        $region40: #{_dense_forward.1} parent=35 // pred_fallthru
          _
        // Predicated region
        $region41: #{_dense_forward.1} parent=35 // pred_check
          %p325 = pneg %p69
        $region42: #{_dense_forward.1} parent=35 // pred_check_branch
          %327 = sbr.rel (%p325) target = $region44
        $region43: #{_dense_forward.1} parent=35 // pred_region
          %p328 = scmp.lt.s32.totalorder %s23, 1
          %s329 = scalar_select %p328, %s23, 1
          %s330 = smul.addr %s329, 2
          %s331 = smul.addr %s330, 4
          %s332 = scalar_lea.vmem %s1, %s331
        $region44: #{_dense_forward.1} parent=35 // pred_fallthru
          _
        // Predicated region
        $region45: #{_dense_forward.1} parent=35 // pred_check
          %p333 = pneg %p95
        $region46: #{_dense_forward.1} parent=35 // pred_check_branch
          %335 = sbr.rel (%p333) target = $region48
        $region47: #{_dense_forward.1} parent=35 // pred_region
          %p336 = scmp.lt.s32.totalorder %s23, 1
          %s337 = scalar_select %p336, %s23, 1
          %s338 = smul.addr %s337, 8
          %s339 = scalar_lea.vmem %s2, %s338
        $region48: #{_dense_forward.1} parent=35 // pred_fallthru
          _
        // Predicated region
        $region49: #{_dense_forward.1} parent=35 // pred_check
          %p340 = pneg %p121
        $region50: #{_dense_forward.1} parent=35 // pred_check_branch
          %342 = sbr.rel (%p340) target = $region52
        $region51: #{_dense_forward.1} parent=35 // pred_region
          %p343 = scmp.lt.s32.totalorder %s23, 1
          %s344 = scalar_select %p343, %s23, 1
          %s345 = smul.addr %s344, 4
          %s346 = scalar_lea.vmem %s3, %s345
        $region52: #{_dense_forward.1} parent=35 // pred_fallthru
          _
      $region36: #{_dense_forward.1} parent=5 // pred_fallthru
        _
      %p347 = scmp.le.s32.totalorder 1, %s23
      %p348 = scmp.lt.s32.totalorder %s23, 3
      %p349 = pnand %p347, %p348
      %p350 = pneg %p349
      // Predicated region
      $region53: #{_dense_forward.1} parent=5 // pred_check
        _
      $region54: #{_dense_forward.1} parent=5 // pred_check_branch
        %352 = sbr.rel (%p349) target = $region56
      $region55: #{_dense_forward.1} parent=5 // pred_region
        %s353 = ssub.s32 %s23, 1
        %p354 = scmp.lt.s32.totalorder %s28, 1
        %s355 = scalar_select %p354, %s28, 1
        %s356 = smul.addr %s355, 4
        %s357 = scalar_lea.vmem %s0, %s356
        %p358 = pneg %p49
        %p359 = pneg %p46
        %p360 = scmp.lt.s32.totalorder %s28, 1
        %s361 = scalar_select %p360, %s28, 1
        %s362 = smul.addr %s361, 2
        %s363 = smul.addr %s362, 4
        %s364 = scalar_lea.vmem %s1, %s363
        %p365 = pneg %p75
        %p366 = pneg %p72
        %p367 = scmp.lt.s32.totalorder %s28, 1
        %s368 = scalar_select %p367, %s28, 1
        %s369 = smul.addr %s368, 8
        %s370 = scalar_lea.vmem %s2, %s369
        %p371 = pneg %p101
        %p372 = pneg %p98
        %p373 = scmp.lt.s32.totalorder %s28, 1
        %s374 = scalar_select %p373, %s28, 1
        %s375 = smul.addr %s374, 4
        %s376 = scalar_lea.vmem %s3, %s375
        %p377 = pneg %p127
        %p378 = pneg %p124
        %p379 = pneg %p148
        %p380 = pneg %p145
        %p381 = pneg %p169
        %p382 = pneg %p166
        %p383 = pneg %p190
        %p384 = pneg %p187
        %p385 = pneg %p211
        %p386 = pneg %p208
        %p387 = pneg %p232
        %p388 = pneg %p229
        %p389 = pneg %p258
        %p390 = pneg %p255
        %s391 = sand.u32 %s245, 1
        %s392 = scalar_lea.sflag [#allocation3], %s391
        %s393 = sand.u32 %s245, 1
        %s394 = smul.addr %s393, 32
        %s395 = scalar_lea.vmem [#allocation2], %s394
        %p396 = pneg %p284
        %p397 = pneg %p281
        %s398 = sand.u32 %s271, 1
        %s399 = scalar_lea.sflag [#allocation5], %s398
        %s400 = sand.u32 %s271, 1
        %s401 = smul.addr %s400, 8
        %s402 = scalar_lea.vmem [#allocation4], %s401
        %p403 = scmp.lt.s32.totalorder %s28, 1
        %s404 = scalar_select %p403, %s28, 1
        %s405 = smul.addr %s404, 4
        %s406 = scalar_lea.vmem %s0, %s405
        %p407 = scmp.lt.s32.totalorder %s28, 1
        %s408 = scalar_select %p407, %s28, 1
        %s409 = smul.addr %s408, 2
        %s410 = smul.addr %s409, 4
        %s411 = scalar_lea.vmem %s1, %s410
        %p412 = scmp.lt.s32.totalorder %s28, 1
        %s413 = scalar_select %p412, %s28, 1
        %s414 = smul.addr %s413, 8
        %s415 = scalar_lea.vmem %s2, %s414
        %p416 = scmp.lt.s32.totalorder %s28, 1
        %s417 = scalar_select %p416, %s28, 1
        %s418 = smul.addr %s417, 4
        %s419 = scalar_lea.vmem %s3, %s418
        %v421 = vld [vmem:[%s406] sm:$0xf]
        %v422 = vld [vmem:[%s4] sm:$0xf]
        %v423 = vld [vmem:[%s4 + $0x4] sm:$0xf]
        %v424 = vld [vmem:[%s4 + $0x8] sm:$0xf]
        %v425 = vld [vmem:[%s4 + $0xc] sm:$0xf]
        %v430 = vunpack.c.l.b16 %v422
        %v431 = vunpack.c.l.b16 %v423
        %v432 = vunpack.c.l.b16 %v424
        %v433 = vunpack.c.l.b16 %v425
        %v434 = vpack.c.b16 %v431, %v430
        %v435 = vpack.c.b16 %v433, %v432
        %vm438 = vcmask 261120
        %v440 = vsel %vm438, %v421, 0
        %442 = vmatprep.subr.bf16.mxu0 0
        %443 = vmatpush1.bf16.msra.mxu0 %v434
        %444 = vmatprep.subr.bf16.mxu0 0
        %445 = vmatpush1.bf16.msra.mxu0 %v435
        %446 = vmatprep.subr.bf16.mxu0 0
        %447 = vmatpush1.bf16.msra.mxu0 0
        %448 = vmatprep.subr.bf16.mxu0 0
        %449 = vmatpush1.bf16.msra.mxu0 0
        %450 = vmatprep.subr.bf16.mxu0 0
        %451 = vmatpush1.bf16.msra.mxu0 0
        %452 = vmatprep.subr.bf16.mxu0 0
        %453 = vmatpush1.bf16.msra.mxu0 0
        %454 = vmatprep.subr.bf16.mxu0 0
        %455 = vmatpush1.bf16.msra.mxu0 0
        %456 = vmatprep.subr.bf16.mxu0 0
        %457 = vmatpush1.bf16.msra.mxu0 0
        %458 = vmatprep.subr.bf16.mxu0 0
        %459 = vmatpush1.bf16.msra.mxu0 0
        %460 = vmatprep.subr.bf16.mxu0 0
        %461 = vmatpush1.bf16.msra.mxu0 0
        %462 = vmatprep.subr.bf16.mxu0 0
        %463 = vmatpush1.bf16.msra.mxu0 0
        %464 = vmatprep.subr.bf16.mxu0 0
        %465 = vmatpush1.bf16.msra.mxu0 0
        %466 = vmatprep.subr.bf16.mxu0 0
        %467 = vmatpush1.bf16.msra.mxu0 0
        %468 = vmatprep.subr.bf16.mxu0 0
        %469 = vmatpush1.bf16.msra.mxu0 0
        %470 = vmatprep.subr.bf16.mxu0 0
        %471 = vmatpush1.bf16.msra.mxu0 0
        %472 = vmatprep.subr.bf16.mxu0 0
        %473 = vmatpush1.bf16.msra.mxu0 0
        %474 = vmatprep.mubr.bf16.mxu0 0
        %475 = vmatmul.mubr.bf16.gmra.mrb[0].mxu0 %v440
        %v476 = vpop.f32.mrb[0].mxu0
        %v477 = vadd.f32 0.0, %v476
        %v478 = vpop.f32.mrb[0].mxu0
        %v479 = vpop.f32.mrb[0].mxu0
        %v480 = vpop.f32.mrb[0].mxu0
        %481 = vdwg.mxu0
        %v482 = vld [vmem:[%s411] sm:$0xf]
        %v483 = vld [vmem:[%s411 + $0x4] sm:$0xf]
        %v484 = vld [vmem:[%s5] sm:$0xf]
        %v485 = vld [vmem:[%s5 + $0x4] sm:$0xf]
        %v486 = vld [vmem:[%s5 + $0x8] sm:$0xf]
        %v487 = vld [vmem:[%s5 + $0xc] sm:$0xf]
        %v490 = vunpack.c.l.b16 %v482
        %v491 = vunpack.c.l.b16 %v483
        %v492 = vpack.c.b16 %v491, %v490
        %v497 = vunpack.c.l.b16 %v484
        %v498 = vunpack.c.l.b16 %v485
        %v499 = vunpack.c.l.b16 %v486
        %v500 = vunpack.c.l.b16 %v487
        %v501 = vpack.c.b16 %v498, %v497
        %v502 = vpack.c.b16 %v500, %v499
        %v506 = vsel %vm438, %v492, 0
        %508 = vmatprep.subr.bf16.mxu0 0
        %509 = vmatpush1.bf16.msra.mxu0 %v501
        %510 = vmatprep.subr.bf16.mxu0 0
        %511 = vmatpush1.bf16.msra.mxu0 %v502
        %512 = vmatprep.subr.bf16.mxu0 0
        %513 = vmatpush1.bf16.msra.mxu0 0
        %514 = vmatprep.subr.bf16.mxu0 0
        %515 = vmatpush1.bf16.msra.mxu0 0
        %516 = vmatprep.subr.bf16.mxu0 0
        %517 = vmatpush1.bf16.msra.mxu0 0
        %518 = vmatprep.subr.bf16.mxu0 0
        %519 = vmatpush1.bf16.msra.mxu0 0
        %520 = vmatprep.subr.bf16.mxu0 0
        %521 = vmatpush1.bf16.msra.mxu0 0
        %522 = vmatprep.subr.bf16.mxu0 0
        %523 = vmatpush1.bf16.msra.mxu0 0
        %524 = vmatprep.subr.bf16.mxu0 0
        %525 = vmatpush1.bf16.msra.mxu0 0
        %526 = vmatprep.subr.bf16.mxu0 0
        %527 = vmatpush1.bf16.msra.mxu0 0
        %528 = vmatprep.subr.bf16.mxu0 0
        %529 = vmatpush1.bf16.msra.mxu0 0
        %530 = vmatprep.subr.bf16.mxu0 0
        %531 = vmatpush1.bf16.msra.mxu0 0
        %532 = vmatprep.subr.bf16.mxu0 0
        %533 = vmatpush1.bf16.msra.mxu0 0
        %534 = vmatprep.subr.bf16.mxu0 0
        %535 = vmatpush1.bf16.msra.mxu0 0
        %536 = vmatprep.subr.bf16.mxu0 0
        %537 = vmatpush1.bf16.msra.mxu0 0
        %538 = vmatprep.subr.bf16.mxu0 0
        %539 = vmatpush1.bf16.msra.mxu0 0
        %540 = vmatprep.mubr.bf16.mxu0 0
        %541 = vmatmul.mubr.bf16.gmra.mrb[0].mxu0 %v506
        %v542 = vpop.f32.mrb[0].mxu0
        %v543 = vadd.f32 0.0, %v542
        %v544 = vpop.f32.mrb[0].mxu0
        %v545 = vpop.f32.mrb[0].mxu0
        %v546 = vadd.f32 0.0, %v545
        %v547 = vpop.f32.mrb[0].mxu0
        %548 = vdwg.mxu0
        %v550 = vcombine.high %v477, %v477
        %v552 = vunpack.c.l.s4 1966171168
        %v553 = vunpack.c.0.s8 %v552
        %v554 = vlaneseq
        %v555 = vshrl.u32 %v554, 7
        %v556 = vsub.s32 %v553, %v555
        %v557 = vrot.slane %v477, %v556
        %v559 = vunpack.c.l.s4 1966171168
        %v560 = vunpack.c.0.s8 %v559
        %v561 = vlaneseq
        %v562 = vshrl.u32 %v561, 7
        %v563 = vsub.s32 %v560, %v562
        %v564 = vrot.slane %v550, %v563
        %v565 = vcombine.high %v557, %v557
        %v566 = vcombine.high %v564, %v564
        %v568 = vunpack.c.l.s4 1966171168
        %v569 = vunpack.c.0.s8 %v568
        %v570 = vlaneseq
        %v571 = vshrl.u32 %v570, 7
        %v572 = vsub.s32 %v569, %v571
        %v573 = vrot.slane %v557, %v572
        %v575 = vunpack.c.l.s4 1966171168
        %v576 = vunpack.c.0.s8 %v575
        %v577 = vlaneseq
        %v578 = vshrl.u32 %v577, 7
        %v579 = vsub.s32 %v576, %v578
        %v580 = vrot.slane %v564, %v579
        %v582 = vunpack.c.l.s4 1966171168
        %v583 = vunpack.c.0.s8 %v582
        %v584 = vlaneseq
        %v585 = vshrl.u32 %v584, 7
        %v586 = vsub.s32 %v583, %v585
        %v587 = vrot.slane %v565, %v586
        %v589 = vunpack.c.l.s4 1966171168
        %v590 = vunpack.c.0.s8 %v589
        %v591 = vlaneseq
        %v592 = vshrl.u32 %v591, 7
        %v593 = vsub.s32 %v590, %v592
        %v594 = vrot.slane %v566, %v593
        %v595 = vcombine.high %v573, %v573
        %v596 = vcombine.high %v580, %v580
        %v597 = vcombine.high %v587, %v587
        %v598 = vcombine.high %v594, %v594
        %v599 = vlaneseq
        %v600 = vshrl.u32 %v599, 7
        %v601 = vsub.s32 0, %v600
        %v602 = vrot.slane %v573, %v601
        %v603 = vlaneseq
        %v604 = vshrl.u32 %v603, 7
        %v605 = vsub.s32 0, %v604
        %v606 = vrot.slane %v587, %v605
        %v607 = vlaneseq
        %v608 = vshrl.u32 %v607, 7
        %v609 = vsub.s32 0, %v608
        %v610 = vrot.slane %v595, %v609
        %v611 = vlaneseq
        %v612 = vshrl.u32 %v611, 7
        %v613 = vsub.s32 0, %v612
        %v614 = vrot.slane %v597, %v613
        %v615 = vlaneseq
        %v616 = vshrl.u32 %v615, 7
        %v617 = vsub.s32 0, %v616
        %v618 = vrot.slane %v580, %v617
        %v619 = vlaneseq
        %v620 = vshrl.u32 %v619, 7
        %v621 = vsub.s32 0, %v620
        %v622 = vrot.slane %v594, %v621
        %v623 = vlaneseq
        %v624 = vshrl.u32 %v623, 7
        %v625 = vsub.s32 0, %v624
        %v626 = vrot.slane %v596, %v625
        %v627 = vlaneseq
        %v628 = vshrl.u32 %v627, 7
        %v629 = vsub.s32 0, %v628
        %v630 = vrot.slane %v598, %v629
        %v639 = vadd.f32 %v602, %v543
        %v640 = vadd.f32 %v602, %v546
        %v641 = vadd.f32 %v606, %v543
        %v642 = vadd.f32 %v606, %v546
        %v643 = vadd.f32 %v610, %v543
        %v644 = vadd.f32 %v610, %v546
        %v645 = vadd.f32 %v614, %v543
        %v646 = vadd.f32 %v614, %v546
        %v647 = vadd.f32 %v618, %v543
        %v648 = vadd.f32 %v618, %v546
        %v649 = vadd.f32 %v622, %v543
        %v650 = vadd.f32 %v622, %v546
        %v651 = vadd.f32 %v626, %v543
        %v652 = vadd.f32 %v626, %v546
        %v653 = vadd.f32 %v630, %v543
        %v654 = vadd.f32 %v630, %v546
        %v655 = vld [vmem:[%s6] sm:$0x1]
        %v657 = vlaneseq
        %v658 = vshrl.u32 %v657, 7
        %v659 = vsub.s32 0, %v658
        %v660 = vrot.slane %v655, %v659
        %v662 = vadd.f32 %v639, %v660
        %v663 = vadd.f32 %v640, %v660
        %v664 = vadd.f32 %v641, %v660
        %v665 = vadd.f32 %v642, %v660
        %v666 = vadd.f32 %v643, %v660
        %v667 = vadd.f32 %v644, %v660
        %v668 = vadd.f32 %v645, %v660
        %v669 = vadd.f32 %v646, %v660
        %v670 = vadd.f32 %v647, %v660
        %v671 = vadd.f32 %v648, %v660
        %v672 = vadd.f32 %v649, %v660
        %v673 = vadd.f32 %v650, %v660
        %v674 = vadd.f32 %v651, %v660
        %v675 = vadd.f32 %v652, %v660
        %v676 = vadd.f32 %v653, %v660
        %v677 = vadd.f32 %v654, %v660
        %vm678 = vcmp.gt.f32.partialorder %v662, 0.0
        %vm679 = vcmp.gt.f32.partialorder %v663, 0.0
        %vm680 = vcmp.gt.f32.partialorder %v664, 0.0
        %vm681 = vcmp.gt.f32.partialorder %v665, 0.0
        %vm682 = vcmp.gt.f32.partialorder %v666, 0.0
        %vm683 = vcmp.gt.f32.partialorder %v667, 0.0
        %vm684 = vcmp.gt.f32.partialorder %v668, 0.0
        %vm685 = vcmp.gt.f32.partialorder %v669, 0.0
        %vm686 = vcmp.gt.f32.partialorder %v670, 0.0
        %vm687 = vcmp.gt.f32.partialorder %v671, 0.0
        %vm688 = vcmp.gt.f32.partialorder %v672, 0.0
        %vm689 = vcmp.gt.f32.partialorder %v673, 0.0
        %vm690 = vcmp.gt.f32.partialorder %v674, 0.0
        %vm691 = vcmp.gt.f32.partialorder %v675, 0.0
        %vm692 = vcmp.gt.f32.partialorder %v676, 0.0
        %vm693 = vcmp.gt.f32.partialorder %v677, 0.0
        %v694 = vmin.f32 %v662, 0.0
        %v695 = vmin.f32 %v663, 0.0
        %v696 = vmin.f32 %v664, 0.0
        %v697 = vmin.f32 %v665, 0.0
        %v698 = vmin.f32 %v666, 0.0
        %v699 = vmin.f32 %v667, 0.0
        %v700 = vmin.f32 %v668, 0.0
        %v701 = vmin.f32 %v669, 0.0
        %v702 = vmin.f32 %v670, 0.0
        %v703 = vmin.f32 %v671, 0.0
        %v704 = vmin.f32 %v672, 0.0
        %v705 = vmin.f32 %v673, 0.0
        %v706 = vmin.f32 %v674, 0.0
        %v707 = vmin.f32 %v675, 0.0
        %v708 = vmin.f32 %v676, 0.0
        %v709 = vmin.f32 %v677, 0.0
        %v710 = vmul.f32 %v694, 1.442695
        %v711 = vpow.pop %v710
        %v712 = vmul.f32 %v695, 1.442695
        %v713 = vpow.pop %v712
        %v714 = vmul.f32 %v696, 1.442695
        %v715 = vpow.pop %v714
        %v716 = vmul.f32 %v697, 1.442695
        %v717 = vpow.pop %v716
        %v718 = vmul.f32 %v698, 1.442695
        %v719 = vpow.pop %v718
        %v720 = vmul.f32 %v699, 1.442695
        %v721 = vpow.pop %v720
        %v722 = vmul.f32 %v700, 1.442695
        %v723 = vpow.pop %v722
        %v724 = vmul.f32 %v701, 1.442695
        %v725 = vpow.pop %v724
        %v726 = vmul.f32 %v702, 1.442695
        %v727 = vpow.pop %v726
        %v728 = vmul.f32 %v703, 1.442695
        %v729 = vpow.pop %v728
        %v730 = vmul.f32 %v704, 1.442695
        %v731 = vpow.pop %v730
        %v732 = vmul.f32 %v705, 1.442695
        %v733 = vpow.pop %v732
        %v734 = vmul.f32 %v706, 1.442695
        %v735 = vpow.pop %v734
        %v736 = vmul.f32 %v707, 1.442695
        %v737 = vpow.pop %v736
        %v738 = vmul.f32 %v708, 1.442695
        %v739 = vpow.pop %v738
        %v740 = vmul.f32 %v709, 1.442695
        %v741 = vpow.pop %v740
        %v742 = vsub.f32 %v711, 1.0
        %v743 = vsub.f32 %v713, 1.0
        %v744 = vsub.f32 %v715, 1.0
        %v745 = vsub.f32 %v717, 1.0
        %v746 = vsub.f32 %v719, 1.0
        %v747 = vsub.f32 %v721, 1.0
        %v748 = vsub.f32 %v723, 1.0
        %v749 = vsub.f32 %v725, 1.0
        %v750 = vsub.f32 %v727, 1.0
        %v751 = vsub.f32 %v729, 1.0
        %v752 = vsub.f32 %v731, 1.0
        %v753 = vsub.f32 %v733, 1.0
        %v754 = vsub.f32 %v735, 1.0
        %v755 = vsub.f32 %v737, 1.0
        %v756 = vsub.f32 %v739, 1.0
        %v757 = vsub.f32 %v741, 1.0
        %v758 = vsel %vm678, %v662, %v742
        %v759 = vsel %vm679, %v663, %v743
        %v760 = vsel %vm680, %v664, %v744
        %v761 = vsel %vm681, %v665, %v745
        %v762 = vsel %vm682, %v666, %v746
        %v763 = vsel %vm683, %v667, %v747
        %v764 = vsel %vm684, %v668, %v748
        %v765 = vsel %vm685, %v669, %v749
        %v766 = vsel %vm686, %v670, %v750
        %v767 = vsel %vm687, %v671, %v751
        %v768 = vsel %vm688, %v672, %v752
        %v769 = vsel %vm689, %v673, %v753
        %v770 = vsel %vm690, %v674, %v754
        %v771 = vsel %vm691, %v675, %v755
        %v772 = vsel %vm692, %v676, %v756
        %v773 = vsel %vm693, %v677, %v757
        %v774 = vpack.c.bf16 %v759, %v758
        %v775 = vpack.c.bf16 %v761, %v760
        %v776 = vpack.c.bf16 %v763, %v762
        %v777 = vpack.c.bf16 %v765, %v764
        %v778 = vpack.c.bf16 %v767, %v766
        %v779 = vpack.c.bf16 %v769, %v768
        %v780 = vpack.c.bf16 %v771, %v770
        %v781 = vpack.c.bf16 %v773, %v772
        %v782 = vld [vmem:[%s7] sm:$0xf]
        %v783 = vld [vmem:[%s7 + $0x4] sm:$0xf]
        %v784 = vld [vmem:[%s7 + $0x8] sm:$0xf]
        %v785 = vld [vmem:[%s7 + $0xc] sm:$0xf]
        %v786 = vld [vmem:[%s8] sm:$0xff]
        %v787 = vld [vmem:[%s8 + $0x8] sm:$0xff]
        %v788 = vld [vmem:[%s8 + $0x10] sm:$0xff]
        %v789 = vld [vmem:[%s8 + $0x18] sm:$0xff]
        %791 = vset.pattern.permute.xlu0 0
        %792 = vperm.xlu0 %791, %v786
        %v793 = vpop.permute.xlu0 %792
        %796 = vset.pattern.permute.xlu0 0
        %797 = vperm.xlu0 %796, %v787
        %v798 = vpop.permute.xlu0 %797
        %801 = vset.pattern.permute.xlu0 0
        %802 = vperm.xlu0 %801, %v788
        %v803 = vpop.permute.xlu0 %802
        %806 = vset.pattern.permute.xlu0 0
        %807 = vperm.xlu0 %806, %v789
        %v808 = vpop.permute.xlu0 %807
        %v814 = vunpack.c.l.b16 %v782
        %v815 = vunpack.c.l.b16 %v783
        %v816 = vunpack.c.l.b16 %v784
        %v817 = vunpack.c.l.b16 %v785
        %v818 = vpack.c.b16 %v815, %v814
        %v819 = vpack.c.b16 %v817, %v816
        %v821 = vsel %vm438, %v818, 0
        %v824 = vsel %vm438, %v819, 0
        %v827 = vsel %vm438, %v774, 0
        %v830 = vsel %vm438, %v775, 0
        %v833 = vsel %vm438, %v776, 0
        %v836 = vsel %vm438, %v777, 0
        %v839 = vsel %vm438, %v778, 0
        %v842 = vsel %vm438, %v779, 0
        %v845 = vsel %vm438, %v780, 0
        %v848 = vsel %vm438, %v781, 0
        %850 = vmatprep.subr.bf16.mxu0 0
        %851 = vmatpush1.bf16.xpose.msra.mxu0 %v827
        %852 = vmatprep.subr.bf16.mxu0 0
        %853 = vmatpush1.bf16.xpose.msra.mxu0 %v830
        %854 = vmatprep.subr.bf16.mxu0 0
        %855 = vmatpush1.bf16.xpose.msra.mxu0 %v833
        %856 = vmatprep.subr.bf16.mxu0 0
        %857 = vmatpush1.bf16.xpose.msra.mxu0 %v836
        %858 = vmatprep.subr.bf16.mxu0 0
        %859 = vmatpush1.bf16.xpose.msra.mxu0 %v839
        %860 = vmatprep.subr.bf16.mxu0 0
        %861 = vmatpush1.bf16.xpose.msra.mxu0 %v842
        %862 = vmatprep.subr.bf16.mxu0 0
        %863 = vmatpush1.bf16.xpose.msra.mxu0 %v845
        %864 = vmatprep.subr.bf16.mxu0 0
        %865 = vmatpush1.bf16.xpose.msra.mxu0 %v848
        %866 = vmatprep.subr.bf16.mxu0 0
        %867 = vmatpush1.bf16.xpose.msra.mxu0 0
        %868 = vmatprep.subr.bf16.mxu0 0
        %869 = vmatpush1.bf16.xpose.msra.mxu0 0
        %870 = vmatprep.subr.bf16.mxu0 0
        %871 = vmatpush1.bf16.xpose.msra.mxu0 0
        %872 = vmatprep.subr.bf16.mxu0 0
        %873 = vmatpush1.bf16.xpose.msra.mxu0 0
        %874 = vmatprep.subr.bf16.mxu0 0
        %875 = vmatpush1.bf16.xpose.msra.mxu0 0
        %876 = vmatprep.subr.bf16.mxu0 0
        %877 = vmatpush1.bf16.xpose.msra.mxu0 0
        %878 = vmatprep.subr.bf16.mxu0 0
        %879 = vmatpush1.bf16.xpose.msra.mxu0 0
        %880 = vmatprep.subr.bf16.mxu0 0
        %881 = vmatpush1.bf16.xpose.msra.mxu0 0
        %882 = vmatprep.mubr.bf16.mxu0 0
        %883 = vmatmul.mubr.bf16.gmra.mrb[0].mxu0 %v821
        %v884 = vpop.f32.mrb[0].mxu0
        %v885 = vadd.f32 %v793, %v884
        %v886 = vpop.f32.mrb[0].mxu0
        %v887 = vpop.f32.mrb[0].mxu0
        %v888 = vadd.f32 %v798, %v887
        %v889 = vpop.f32.mrb[0].mxu0
        %890 = vmatprep.mubr.bf16.mxu0 0
        %891 = vmatmul.mubr.bf16.gmra.mrb[0].mxu0 %v824
        %v892 = vpop.f32.mrb[0].mxu0
        %v893 = vadd.f32 %v803, %v892
        %v894 = vpop.f32.mrb[0].mxu0
        %v895 = vpop.f32.mrb[0].mxu0
        %v896 = vadd.f32 %v808, %v895
        %v897 = vpop.f32.mrb[0].mxu0
        %898 = vdwg.mxu0
        %v899 = vlaneseq
        %v900 = vshrl.u32 %v899, 7
        %v901 = vadd.s32 %v900, 8
        %v902 = vadd.s32 %v900, 16
        %v903 = vadd.s32 %v900, 24
        %vm904 = vcmp.ge.s32.totalorder %v900, 20
        %vm905 = vcmp.ge.s32.totalorder %v901, 20
        %vm906 = vcmp.ge.s32.totalorder %v902, 20
        %vm907 = vcmp.ge.s32.totalorder %v903, 20
        %vm908 = vcmp.lt.s32.totalorder %v900, 30
        %vm909 = vcmp.lt.s32.totalorder %v901, 30
        %vm910 = vcmp.lt.s32.totalorder %v902, 30
        %vm911 = vcmp.lt.s32.totalorder %v903, 30
        %vm912 = vmand %vm904, %vm908
        %vm913 = vmand %vm905, %vm909
        %vm914 = vmand %vm906, %vm910
        %vm915 = vmand %vm907, %vm911
        %vm916 = vcmp.lt.s32.totalorder %v900, 10
        %vm917 = vcmp.lt.s32.totalorder %v901, 10
        %vm918 = vcmp.lt.s32.totalorder %v902, 10
        %vm919 = vcmp.lt.s32.totalorder %v903, 10
        %vm920 = vcmp.lt.s32.totalorder %v900, 20
        %vm921 = vcmp.lt.s32.totalorder %v901, 20
        %vm922 = vcmp.lt.s32.totalorder %v902, 20
        %vm923 = vcmp.lt.s32.totalorder %v903, 20
        %v924 = vsel %vm920, 1.1, 0.0
        %v925 = vsel %vm921, 1.1, 0.0
        %v926 = vsel %vm922, 1.1, 0.0
        %v927 = vsel %vm923, 1.1, 0.0
        %v928 = vsel %vm916, 1.0, %v924
        %v929 = vsel %vm917, 1.0, %v925
        %v930 = vsel %vm918, 1.0, %v926
        %v931 = vsel %vm919, 1.0, %v927
        %vm932 = vcmask 1047556
        %v933 = vsel %vm932, %v893, -inf
        %vm934 = vcmask 1045504
        %v935 = vsel %vm934, %v896, -inf
        %v936 = vmax.f32 %v933, %v935
        %v937 = vrot.slane %v936, 4
        %v938 = vmax.f32 %v936, %v937
        %v939 = vrot.slane %v938, 2
        %v940 = vmax.f32 %v938, %v939
        %v941 = vrot.slane %v940, 1
        %v942 = vmax.f32 %v940, %v941
        %v943 = vsub.f32 %v885, %v942
        %v944 = vsub.f32 %v888, %v942
        %v945 = vsub.f32 %v893, %v942
        %v946 = vsub.f32 %v896, %v942
        %v947 = vmin.f32 %v885, 0.0
        %v948 = vmin.f32 %v888, 0.0
        %v949 = vmin.f32 %v893, 0.0
        %v950 = vmin.f32 %v896, 0.0
        %v951 = vsel %vm912, 1, 0
        %v952 = vsel %vm913, 1, 0
        %v953 = vsel %vm914, 1, 0
        %v954 = vsel %vm915, 1, 0
        %vm955 = vcmp.eq.s32.totalorder %v951, 1
        %vm956 = vcmp.eq.s32.totalorder %v952, 1
        %vm957 = vcmp.eq.s32.totalorder %v953, 1
        %vm958 = vcmp.eq.s32.totalorder %v954, 1
        %v959 = vsel %vm955, %v943, %v947
        %v960 = vsel %vm956, %v944, %v948
        %v961 = vsel %vm957, %v945, %v949
        %v962 = vsel %vm958, %v946, %v950
        %v963 = vmul.f32 %v959, 1.442695
        %v964 = vpow.pop %v963
        %v965 = vmul.f32 %v960, 1.442695
        %v966 = vpow.pop %v965
        %v967 = vmul.f32 %v961, 1.442695
        %v968 = vpow.pop %v967
        %v969 = vmul.f32 %v962, 1.442695
        %v970 = vpow.pop %v969
        %vm973 = vcmask 1043456
        %v974 = vrot.slane %v968, 4
        %v975 = vrot.slane %v970, 4
        %v976 = vsel %vm973, %v974, %v975
        %vm979 = vcmask 1041408
        %v980 = vsel %vm979, %v975, 0.0
        %v981 = vadd.f32 %v976, %v980
        %v982 = vrot.slane %v981, 4
        %v983 = vadd.f32 %v981, %v982
        %v984 = vrot.slane %v983, 2
        %v985 = vadd.f32 %v983, %v984
        %v986 = vrot.slane %v985, 1
        %v987 = vadd.f32 %v985, %v986
        %v988 = vrcp.pop %v987
        %v989 = vmul.f32 %v964, %v988
        %v990 = vmul.f32 %v966, %v988
        %v991 = vmul.f32 %v968, %v988
        %v992 = vmul.f32 %v970, %v988
        %vm993 = vcmp.gt.f32.partialorder %v885, 0.0
        %vm994 = vcmp.gt.f32.partialorder %v888, 0.0
        %vm995 = vcmp.gt.f32.partialorder %v893, 0.0
        %vm996 = vcmp.gt.f32.partialorder %v896, 0.0
        %v997 = vsub.f32 %v964, 1.0
        %v998 = vsub.f32 %v966, 1.0
        %v999 = vsub.f32 %v968, 1.0
        %v1000 = vsub.f32 %v970, 1.0
        %v1001 = vsel %vm993, %v885, %v997
        %v1002 = vsel %vm994, %v888, %v998
        %v1003 = vsel %vm995, %v893, %v999
        %v1004 = vsel %vm996, %v896, %v1000
        %v1005 = vadd.f32 %v1001, %v928
        %v1006 = vadd.f32 %v1002, %v929
        %v1007 = vadd.f32 %v1003, %v930
        %v1008 = vadd.f32 %v1004, %v931
        %v1009 = vsel %vm955, %v989, %v1005
        %v1010 = vsel %vm956, %v990, %v1006
        %v1011 = vsel %vm957, %v991, %v1007
        %v1012 = vsel %vm958, %v992, %v1008
        %1013 = vst [vmem:[%s395] sm:$0xff] %v1009
        %1014 = vst [vmem:[%s395 + $0x8] sm:$0xff] %v1010
        %1015 = vst [vmem:[%s395 + $0x10] sm:$0xff] %v1011
        %1016 = vst [vmem:[%s395 + $0x18] sm:$0xff] %v1012
        %v1017 = vld [vmem:[%s415] sm:$0xff]
        %v1018 = vld [vmem:[%s419] sm:$0x7]
        %1020 = vset.pattern.permute.xlu0 0
        %1021 = vperm.xlu0 %1020, %v1017
        %v1022 = vpop.permute.xlu0 %1021
        %v1024 = vlaneseq
        %v1025 = vshrl.u32 %v1024, 7
        %v1026 = vsub.s32 0, %v1025
        %v1027 = vrot.slane %v1018, %v1026
        %v1028 = vsub.f32 %v1022, %v1027
        %v1029 = vmul.f32 %v1028, %v1028
        %v1030 = vadd.f32 %v1029, 0.0
        %1031 = vset.pattern.permute.xlu0 1
        %1032 = vperm.xlu0 %1031, %v1017
        %v1033 = vpop.permute.xlu0 %1032
        %v1035 = vlaneseq
        %v1036 = vshrl.u32 %v1035, 7
        %v1037 = vsub.s32 1, %v1036
        %v1038 = vrot.slane %v1018, %v1037
        %v1039 = vsub.f32 %v1033, %v1038
        %v1040 = vmul.f32 %v1039, %v1039
        %v1041 = vadd.f32 %v1030, %v1040
        %1042 = vset.pattern.permute.xlu0 2
        %1043 = vperm.xlu0 %1042, %v1017
        %v1044 = vpop.permute.xlu0 %1043
        %v1046 = vlaneseq
        %v1047 = vshrl.u32 %v1046, 7
        %v1048 = vsub.s32 2, %v1047
        %v1049 = vrot.slane %v1018, %v1048
        %v1050 = vsub.f32 %v1044, %v1049
        %v1051 = vmul.f32 %v1050, %v1050
        %v1052 = vadd.f32 %v1041, %v1051
        %v1053 = vrsqrt.pop %v1052
        %v1054 = vmul.f32 %v1052, %v1053
        %vm1055 = vcmp.eq.f32.partialorder %v1052, inf
        %v1056 = vsel %vm1055, %v1052, %v1054
        %vm1057 = vcmp.eq.f32.partialorder %v1052, 0.0
        %v1058 = vand.u32 %v1052, 2147483648
        %v1059 = vsel %vm1057, %v1058, %v1056
        %vm1060 = vcmask 130048
        %1061 = vst.msk [vmem:[%s402] sm:$0xff] %vm1060, %v1059
        %s1062 = sand.u32 %s245, 1
        %s1063 = scalar_lea.sflag [#allocation3], %s1062
        %s1064 = sand.u32 %s245, 1
        %s1065 = smul.addr %s1064, 32
        %s1066 = scalar_lea.vmem [#allocation2], %s1065
        %s1067 = sand.u32 %s271, 1
        %s1068 = scalar_lea.sflag [#allocation5], %s1067
        %s1069 = sand.u32 %s271, 1
        %s1070 = smul.addr %s1069, 8
        %s1071 = scalar_lea.vmem [#allocation4], %s1070
        // Predicated region
        $region57: #{_dense_forward.1} parent=55 // pred_check
          %p1072 = pneg %p255
        $region58: #{_dense_forward.1} parent=55 // pred_check_branch
          %1074 = sbr.rel (%p1072) target = $region60
        $region59: #{_dense_forward.1} parent=55 // pred_region
          %s1076 = ssub.s32 512, 512
          %1077 = vsyncadd %s1063, %s1076
          %s1078 = smul.addr %s28, 4
          %s1079 = smul.addr %s1078, 128
          %s1080 = scalar_lea.hbm %s9, %s1079
          %s1081 = sshll.u32 %s1066, 4
          %s1082 = int_to_ptr.vmem [resolvable:$true] %s1081
          %1087 = dma.vmem_to_hbm [thread:$0]  %s1082, 512, %s1080, %s1063, 128, 128, 8
        $region60: #{_dense_forward.1} parent=55 // pred_fallthru
          _
        // Predicated region
        $region61: #{_dense_forward.1} parent=55 // pred_check
          %p1088 = pneg %p281
        $region62: #{_dense_forward.1} parent=55 // pred_check_branch
          %1090 = sbr.rel (%p1088) target = $region64
        $region63: #{_dense_forward.1} parent=55 // pred_region
          %s1092 = ssub.s32 128, 128
          %1093 = vsyncadd %s1068, %s1092
          %s1094 = smul.addr %s28, 128
          %s1095 = scalar_lea.hbm %s10, %s1094
          %s1097 = sshll.u32 %s1071, 4
          %s1098 = int_to_ptr.vmem [resolvable:$true] %s1097
          %1100 = dma.vmem_to_hbm [thread:$0]  %s1098, 128, %s1095, %s1068
        $region64: #{_dense_forward.1} parent=55 // pred_fallthru
          _
      $region56: #{_dense_forward.1} parent=5 // pred_fallthru
        _
      %p1101 = scmp.le.s32.totalorder 2, %s23
      // Predicated region
      $region65: #{_dense_forward.1} parent=5 // pred_check
        %p1102 = pneg %p1101
      $region66: #{_dense_forward.1} parent=5 // pred_check_branch
        %1104 = sbr.rel (%p1102) target = $region68
      $region67: #{_dense_forward.1} parent=5 // pred_region
        %s1105 = ssub.s32 %s23, 2
        // Predicated region
        $region69: #{_dense_forward.1} parent=67 // pred_check
          %p1106 = pneg %p261
        $region70: #{_dense_forward.1} parent=67 // pred_check_branch
          %1108 = sbr.rel (%p1106) target = $region72
        $region71: #{_dense_forward.1} parent=67 // pred_region
          %s1109 = sand.u32 %s246, 1
          %s1110 = scalar_lea.sflag [#allocation3], %s1109
          %s1111 = sand.u32 %s246, 1
          %s1112 = smul.addr %s1111, 32
          %s1113 = scalar_lea.vmem [#allocation2], %s1112
          %1114 = dma.done %s1110, 512
        $region72: #{_dense_forward.1} parent=67 // pred_fallthru
          _
        // Predicated region
        $region73: #{_dense_forward.1} parent=67 // pred_check
          %p1115 = pneg %p287
        $region74: #{_dense_forward.1} parent=67 // pred_check_branch
          %1117 = sbr.rel (%p1115) target = $region76
        $region75: #{_dense_forward.1} parent=67 // pred_region
          %s1118 = sand.u32 %s272, 1
          %s1119 = scalar_lea.sflag [#allocation5], %s1118
          %s1120 = sand.u32 %s272, 1
          %s1121 = smul.addr %s1120, 8
          %s1122 = scalar_lea.vmem [#allocation4], %s1121
          %1123 = dma.done %s1119, 128
        $region76: #{_dense_forward.1} parent=67 // pred_fallthru
          _
      $region68: #{_dense_forward.1} parent=5 // pred_fallthru
        _
    $region6: #{_dense_forward.1} parent=1 // loop_footer
      %s27 = sadd.s32 1, %s23
    $region7: #{_dense_forward.1} parent=1 // loop_footer_branch
      %22 = sbr.rel target = $region3
    $region8: #{_dense_forward.1} parent=1 // loop_exit
      _
    %1124 = vsyncpa [#allocation3], 1
    %s1125 = scalar_lea.sflag [#allocation3], 1
    %1126 = vsyncpa %s1125, 1
    %1127 = vsyncpa [#allocation5], 1
    %s1128 = scalar_lea.sflag [#allocation5], 1
    %1129 = vsyncpa %s1128, 1

</llo_original>
